<compile_context>
chip_gen: v5e
topology: v5e:2x2
jax: 0.10.0
libtpu: 0.0.40
codegen_flags: <defaults>
</compile_context>

<pallas_src>
import functools

import jax
import jax.numpy as jnp
from jax.experimental import pallas as pl
from jax.experimental.pallas import tpu as pltpu


def _torsion_loss_kernel(a_ref, at_ref, aat_ref, out_ref, *, n_valid, tile_n, inv_n):
    step = pl.program_id(0)

    @pl.when(step == 0)
    def _init():
        out_ref[...] = jnp.zeros_like(out_ref)

    a = a_ref[...].astype(jnp.float32)       # (D_pad, tile_n)
    at = at_ref[...].astype(jnp.float32)     # (D_pad, tile_n)
    aat = aat_ref[...].astype(jnp.float32)   # (D_pad, tile_n)

    # lane-validity mask: columns are list items; padded columns are excluded.
    col = jax.lax.broadcasted_iota(jnp.int32, (1, tile_n), 1) + step * tile_n
    valid = col < n_valid                                              # (1, tile_n)

    # per-item squared Frobenius norm: reduce over the sublane (D) axis.
    ss = jnp.sum(a * a, axis=0, keepdims=True)                         # (1, tile_n)
    ss_safe = jnp.where(valid, ss, 1.0)                                # avoid rsqrt(0) NaN on pad
    inv_l = jax.lax.rsqrt(ss_safe)                                     # EUP
    l = ss_safe * inv_l                                                # = sqrt(ss) for valid items

    a_norm = a * inv_l                                                 # broadcast mul on VPU

    d_t = a_norm - at
    d_at = a_norm - aat
    tor_sq = jnp.sum(d_t * d_t, axis=0, keepdims=True)                 # ||.||^2   (1, tile_n)
    tor_n = jnp.sqrt(jnp.sum(d_at * d_at, axis=0, keepdims=True))      # ||.||     (1, tile_n)
    # note the asymmetry (squared norm vs plain norm) is faithful to the source
    l_torsion = jnp.minimum(tor_sq, tor_n)

    l_anglenorm = jnp.abs(l - 1.0)

    contrib = jnp.where(valid, l_torsion + 0.02 * l_anglenorm, 0.0)
    out_ref[...] += jnp.sum(contrib, keepdims=True)                    # (1, 1) accumulator

    @pl.when(step == pl.num_programs(0) - 1)
    def _finalize():
        out_ref[...] = out_ref[...] * inv_n


def torsion_angle_loss(angles, angles_t, angles_at, *, max_tile_n=2048):
    """angles, angles_t, angles_at: float arrays of shape [N, D] (item i flattened to D)."""
    N, D = angles.shape
    assert angles_t.shape == (N, D) and angles_at.shape == (N, D)

    # lane-dense layout: items -> lanes, flattened angle elements -> sublanes.
    d_pad = max(8, -(-D // 8) * 8)
    n_128 = -(-N // 128) * 128
    tile_n = min(max_tile_n, n_128)
    n_pad = -(-N // tile_n) * tile_n

    def prep(x):
        x = jnp.asarray(x)
        x = jnp.pad(x, ((0, n_pad - N), (0, d_pad - D)))
        return x.T                                                     # (d_pad, n_pad)

    a, at, aat = prep(angles), prep(angles_t), prep(angles_at)

    kernel = functools.partial(
        _torsion_loss_kernel, n_valid=N, tile_n=tile_n, inv_n=1.0 / N
    )

    out = pl.pallas_call(
        kernel,
        out_shape=jax.ShapeDtypeStruct((1, 1), jnp.float32),
        grid_spec=pltpu.PrefetchScalarGridSpec(
            num_scalar_prefetch=0,
            grid=(n_pad // tile_n,),
            in_specs=[
                pl.BlockSpec((d_pad, tile_n), lambda i: (0, i)),
                pl.BlockSpec((d_pad, tile_n), lambda i: (0, i)),
                pl.BlockSpec((d_pad, tile_n), lambda i: (0, i)),
            ],
            out_specs=pl.BlockSpec((1, 1), lambda i: (0, 0)),
        ),
        compiler_params=pltpu.CompilerParams(
            dimension_semantics=("arbitrary",),
        ),
    )(a, at, aat)
    return out[0, 0]


def _reference(angles, angles_t, angles_at):
    # plain-JAX reference of the same semantics
    l = jnp.linalg.norm(angles, axis=-1, keepdims=True)
    a_norm = angles / l
    tor_sq = jnp.sum((a_norm - angles_t) ** 2, axis=-1)
    tor_n = jnp.linalg.norm(a_norm - angles_at, axis=-1)
    l_tor = jnp.minimum(tor_sq, tor_n)
    l_an = jnp.abs(l[:, 0] - 1.0)
    return jnp.mean(l_tor) + 0.02 * jnp.mean(l_an)


if __name__ == "__main__":
    key = jax.random.PRNGKey(0)

    # Test 1: small shapes (8 list entries, 32 flattened angle elements each).
    k1, k2, k3 = jax.random.split(key, 3)
    N, D = 8, 32
    angles = jax.random.normal(k1, (N, D), dtype=jnp.float32)
    angles_t = jax.random.normal(k2, (N, D), dtype=jnp.float32)
    angles_at = jax.random.normal(k3, (N, D), dtype=jnp.float32)

    loss = jax.block_until_ready(torsion_angle_loss(angles, angles_t, angles_at))
    ref = _reference(angles, angles_t, angles_at)
    assert jnp.allclose(loss, ref, rtol=1e-4, atol=1e-5), (loss, ref)

    # Test 2: exercises lane padding/masking and multi-step grid accumulation
    # (N=300 items, D=14 = 7 torsions x sin/cos; small tile forces 3 grid steps).
    k4, k5, k6 = jax.random.split(jax.random.PRNGKey(1), 3)
    N2, D2 = 300, 14
    a2 = jax.random.normal(k4, (N2, D2), dtype=jnp.float32)
    t2 = jax.random.normal(k5, (N2, D2), dtype=jnp.float32)
    at2 = jax.random.normal(k6, (N2, D2), dtype=jnp.float32)

    loss2 = jax.block_until_ready(torsion_angle_loss(a2, t2, at2, max_tile_n=128))
    ref2 = _reference(a2, t2, at2)
    assert jnp.allclose(loss2, ref2, rtol=1e-4, atol=1e-5), (loss2, ref2)

    print("KERNEL_OK")
</pallas_src>

<mosaic_0001>
module attributes {stable_mosaic.version = 11 : i64} {
  func.func @_torsion_loss_kernel(%arg0: i32, %arg1: memref<32x128xf32, #tpu.memory_space<vmem>>, %arg2: memref<32x128xf32, #tpu.memory_space<vmem>>, %arg3: memref<32x128xf32, #tpu.memory_space<vmem>>, %arg4: memref<1x1xf32, #tpu.memory_space<vmem>>) attributes {dimension_semantics = [#tpu.dimension_semantics<arbitrary>], iteration_bounds = array<i64: 1>, scalar_prefetch = 0 : i64, scratch_operands = 0 : i64, tpu.core_type = #tpu.core_type<tc>, window_params = [{transform_indices = @transform_0, window_bounds = array<i64: 32, 128>}, {transform_indices = @transform_1, window_bounds = array<i64: 32, 128>}, {transform_indices = @transform_2, window_bounds = array<i64: 32, 128>}, {pipeline_mode = #tpu.pipeline_mode<synchronous>, transform_indices = @transform_3, window_bounds = array<i64: 1, 1>}]} {
    %c0_i32 = arith.constant 0 : i32
    %0 = arith.cmpi eq, %arg0, %c0_i32 : i32
    %1 = arith.extui %0 : i1 to i32
    %c0_i32_0 = arith.constant 0 : i32
    %2 = arith.cmpi ne, %1, %c0_i32_0 : i32
    scf.if %2 {
      %cst_19 = arith.constant 0.000000e+00 : f32
      %50 = vector.broadcast %cst_19 : f32 to vector<1x1xf32>
      %c0_20 = arith.constant 0 : index
      %c0_21 = arith.constant 0 : index
      %51 = vector.load %arg4[%c0_20, %c0_21] : memref<1x1xf32, #tpu.memory_space<vmem>>, vector<1x1xf32>
      tpu.vector_store %arg4[%c0_20, %c0_21], %50 {strides = array<i32>} : memref<1x1xf32, #tpu.memory_space<vmem>>, vector<1x1xf32>,
    } else {
    }
    %c0 = arith.constant 0 : index
    %c0_1 = arith.constant 0 : index
    %3 = vector.load %arg1[%c0, %c0_1] : memref<32x128xf32, #tpu.memory_space<vmem>>, vector<32x128xf32>
    %c0_2 = arith.constant 0 : index
    %c0_3 = arith.constant 0 : index
    %4 = vector.load %arg2[%c0_2, %c0_3] : memref<32x128xf32, #tpu.memory_space<vmem>>, vector<32x128xf32>
    %c0_4 = arith.constant 0 : index
    %c0_5 = arith.constant 0 : index
    %5 = vector.load %arg3[%c0_4, %c0_5] : memref<32x128xf32, #tpu.memory_space<vmem>>, vector<32x128xf32>
    %6 = tpu.iota {dimensions = array<i32: 1>} : vector<1x128xi32>
    %c128_i32 = arith.constant 128 : i32
    %7 = arith.muli %arg0, %c128_i32 : i32
    %8 = vector.broadcast %7 : i32 to vector<1x128xi32>
    %9 = arith.addi %6, %8 : vector<1x128xi32>
    %c8_i32 = arith.constant 8 : i32
    %10 = vector.broadcast %c8_i32 : i32 to vector<1x128xi32>
    %11 = arith.cmpi slt, %9, %10 : vector<1x128xi32>
    %12 = arith.mulf %3, %3 : vector<32x128xf32>
    %cst = arith.constant dense<0.000000e+00> : vector<128xf32>
    %13 = vector.multi_reduction <add>, %12, %cst [0] : vector<32x128xf32> to vector<128xf32>
    %14 = vector.shape_cast %13 : vector<128xf32> to vector<1x128xf32>
    %cst_6 = arith.constant 1.000000e+00 : f32
    %15 = vector.broadcast %cst_6 : f32 to vector<1x128xf32>
    %16 = arith.select %11, %14, %15 : vector<1x128xi1>, vector<1x128xf32>
    %17 = math.rsqrt %16 : vector<1x128xf32>
    %18 = arith.mulf %16, %17 : vector<1x128xf32>
    %19 = vector.broadcast %17 : vector<1x128xf32> to vector<32x128xf32>
    %20 = arith.mulf %3, %19 : vector<32x128xf32>
    %21 = arith.subf %20, %4 : vector<32x128xf32>
    %22 = arith.subf %20, %5 : vector<32x128xf32>
    %23 = arith.mulf %21, %21 : vector<32x128xf32>
    %cst_7 = arith.constant dense<0.000000e+00> : vector<128xf32>
    %24 = vector.multi_reduction <add>, %23, %cst_7 [0] : vector<32x128xf32> to vector<128xf32>
    %25 = vector.shape_cast %24 : vector<128xf32> to vector<1x128xf32>
    %26 = arith.mulf %22, %22 : vector<32x128xf32>
    %cst_8 = arith.constant dense<0.000000e+00> : vector<128xf32>
    %27 = vector.multi_reduction <add>, %26, %cst_8 [0] : vector<32x128xf32> to vector<128xf32>
    %28 = vector.shape_cast %27 : vector<128xf32> to vector<1x128xf32>
    %29 = math.sqrt %28 : vector<1x128xf32>
    %30 = arith.minimumf %25, %29 : vector<1x128xf32>
    %cst_9 = arith.constant 1.000000e+00 : f32
    %31 = vector.broadcast %cst_9 : f32 to vector<1x128xf32>
    %32 = arith.subf %18, %31 : vector<1x128xf32>
    %33 = math.absf %32 : vector<1x128xf32>
    %cst_10 = arith.constant 2.000000e-02 : f32
    %34 = vector.broadcast %cst_10 : f32 to vector<1x128xf32>
    %35 = arith.mulf %34, %33 : vector<1x128xf32>
    %36 = arith.addf %30, %35 : vector<1x128xf32>
    %cst_11 = arith.constant 0.000000e+00 : f32
    %37 = vector.broadcast %cst_11 : f32 to vector<1x128xf32>
    %38 = arith.select %11, %36, %37 : vector<1x128xi1>, vector<1x128xf32>
    %c0_12 = arith.constant 0 : index
    %c0_13 = arith.constant 0 : index
    %39 = vector.load %arg4[%c0_12, %c0_13] : memref<1x1xf32, #tpu.memory_space<vmem>>, vector<1x1xf32>
    %40 = vector.shape_cast %38 : vector<1x128xf32> to vector<1x1x128xf32>
    %cst_14 = arith.constant dense<0.000000e+00> : vector<1xf32>
    %41 = vector.multi_reduction <add>, %40, %cst_14 [1, 2] : vector<1x1x128xf32> to vector<1xf32>
    %42 = vector.shape_cast %41 : vector<1xf32> to vector<1x1x1xf32>
    %43 = vector.extract %42[0, 0, 0] : f32 from vector<1x1x1xf32>
    %44 = vector.broadcast %43 : f32 to vector<1x1xf32>
    %45 = arith.addf %39, %44 : vector<1x1xf32>
    %c0_15 = arith.constant 0 : index
    %c0_16 = arith.constant 0 : index
    %46 = vector.load %arg4[%c0_15, %c0_16] : memref<1x1xf32, #tpu.memory_space<vmem>>, vector<1x1xf32>
    tpu.vector_store %arg4[%c0_15, %c0_16], %45 {strides = array<i32>} : memref<1x1xf32, #tpu.memory_space<vmem>>, vector<1x1xf32>,
    %c0_i32_17 = arith.constant 0 : i32
    %47 = arith.cmpi eq, %arg0, %c0_i32_17 : i32
    %48 = arith.extui %47 : i1 to i32
    %c0_i32_18 = arith.constant 0 : i32
    %49 = arith.cmpi ne, %48, %c0_i32_18 : i32
    scf.if %49 {
      %c0_19 = arith.constant 0 : index
      %c0_20 = arith.constant 0 : index
      %50 = vector.load %arg4[%c0_19, %c0_20] : memref<1x1xf32, #tpu.memory_space<vmem>>, vector<1x1xf32>
      %cst_21 = arith.constant 1.250000e-01 : f32
      %51 = vector.broadcast %cst_21 : f32 to vector<1x1xf32>
      %52 = arith.mulf %50, %51 : vector<1x1xf32>
      %c0_22 = arith.constant 0 : index
      %c0_23 = arith.constant 0 : index
      %53 = vector.load %arg4[%c0_22, %c0_23] : memref<1x1xf32, #tpu.memory_space<vmem>>, vector<1x1xf32>
      tpu.vector_store %arg4[%c0_22, %c0_23], %52 {strides = array<i32>} : memref<1x1xf32, #tpu.memory_space<vmem>>, vector<1x1xf32>,
    } else {
    }
    return
  }
  func.func @transform_0(%arg0: i32) -> (i32, i32) {
    %c0_i32 = arith.constant 0 : i32
    %c0_i32_0 = arith.constant 0 : i32
    return %c0_i32, %arg0 : i32, i32
  }
  func.func @transform_1(%arg0: i32) -> (i32, i32) {
    %c0_i32 = arith.constant 0 : i32
    %c0_i32_0 = arith.constant 0 : i32
    return %c0_i32, %arg0 : i32, i32
  }
  func.func @transform_2(%arg0: i32) -> (i32, i32) {
    %c0_i32 = arith.constant 0 : i32
    %c0_i32_0 = arith.constant 0 : i32
    return %c0_i32, %arg0 : i32, i32
  }
  func.func @transform_3(%arg0: i32) -> (i32, i32) {
    %c0_i32 = arith.constant 0 : i32
    %c0_i32_0 = arith.constant 0 : i32
    %c0_i32_1 = arith.constant 0 : i32
    return %c0_i32, %c0_i32_0 : i32, i32
  }
}

</mosaic_0001>

<llo_original>
// kernel: tpu_custom_call.1
$region0: #{tpu_custom_call.1}
  #allocation0 [shape = 'u32[]', space=smem, size = 0x4, offset = 0x4, fixed_abs, tag = 'smem constant byte address 0x4 - core index']
  #allocation1 [shape = 'u32[72,128]{1,0:T(1,128)}', space=vmem, size = 0x9000, scoped, tag = 'internal scratch']
  %s0 = inlined_call_operand.hbm [shape: f32[32,128], index: 0, kind: input, shape index: {}]
  %s1 = inlined_call_operand.hbm [shape: f32[32,128], index: 1, kind: input, shape index: {}]
  %s2 = inlined_call_operand.hbm [shape: f32[32,128], index: 2, kind: input, shape index: {}]
  %s3 = inlined_call_operand.hbm [shape: f32[1,1], index: 3, kind: output, shape index: {}]
  %s4 = sld [smem:[#allocation0]]
  $region42: #{tpu_custom_call.1} parent=0
    _
  %s6 = ssub.s32 1, %s4
  %s7 = scalar_select 0, %s6, %s4
  $region1: #{tpu_custom_call.1} parent=0
    #allocation2 [shape = 'u8[16384]{0}', space=vmem, size = 0x4000, scoped, tag = 'input window, operand 0, single buffered']
    #allocation3 [shape = 's32[1]{0}', space=sflag, size = 0x4, scoped, tag = 'scoped memory for tpu_custom_call.1']
    #allocation4 [shape = 's32[1]{0}', space=sflag, size = 0x4, scoped, tag = 'scoped memory for tpu_custom_call.1']
    #allocation5 [shape = 'u8[16384]{0}', space=vmem, size = 0x4000, scoped, tag = 'input window, operand 1, single buffered']
    #allocation6 [shape = 's32[1]{0}', space=sflag, size = 0x4, scoped, tag = 'scoped memory for tpu_custom_call.1']
    #allocation7 [shape = 'u8[16384]{0}', space=vmem, size = 0x4000, scoped, tag = 'input window, operand 2, single buffered']
    #allocation8 [shape = 'u8[512]{0}', space=vmem, size = 0x400, scoped, tag = 'output window, operand 0, single buffered']
    %8 = vsyncpa [#allocation3], 0
    %9 = vsyncpa [#allocation6], 0
    %10 = vsyncpa [#allocation4], 0
    // Predicated region
    $region2: #{tpu_custom_call.1} parent=1 // pred_check
      _
    $region3: #{tpu_custom_call.1} parent=1 // pred_check_branch
      %12 = sbr.rel (0) target = $region5
    $region4: #{tpu_custom_call.1} parent=1 // pred_region
      %14 = vsyncadd [#allocation3], 0
      %s15 = sshll.u32 %s0, 4
      %s16 = int_to_ptr.hbm [resolvable:$true] %s15
      %s17 = sshll.u32 [#allocation2], 4
      %s18 = int_to_ptr.vmem [resolvable:$true] %s17
      %23 = dma.hbm_to_vmem [thread:$0]  %s16, 512, %s18, [#allocation3], 128, 128, 8
    $region5: #{tpu_custom_call.1} parent=1 // pred_fallthru
      _
    // Predicated region
    $region6: #{tpu_custom_call.1} parent=1 // pred_check
      _
    $region7: #{tpu_custom_call.1} parent=1 // pred_check_branch
      %25 = sbr.rel (0) target = $region9
    $region8: #{tpu_custom_call.1} parent=1 // pred_region
      %27 = vsyncadd [#allocation6], 0
      %s28 = sshll.u32 %s1, 4
      %s29 = int_to_ptr.hbm [resolvable:$true] %s28
      %s30 = sshll.u32 [#allocation5], 4
      %s31 = int_to_ptr.vmem [resolvable:$true] %s30
      %36 = dma.hbm_to_vmem [thread:$0]  %s29, 512, %s31, [#allocation6], 128, 128, 8
    $region9: #{tpu_custom_call.1} parent=1 // pred_fallthru
      _
    // Predicated region
    $region10: #{tpu_custom_call.1} parent=1 // pred_check
      _
    $region11: #{tpu_custom_call.1} parent=1 // pred_check_branch
      %38 = sbr.rel (0) target = $region13
    $region12: #{tpu_custom_call.1} parent=1 // pred_region
      %40 = vsyncadd [#allocation6], 0
      %s41 = sshll.u32 %s2, 4
      %s42 = int_to_ptr.hbm [resolvable:$true] %s41
      %s43 = sshll.u32 [#allocation7], 4
      %s44 = int_to_ptr.vmem [resolvable:$true] %s43
      %49 = dma.hbm_to_vmem [thread:$0]  %s42, 512, %s44, [#allocation6], 128, 128, 8
    $region13: #{tpu_custom_call.1} parent=1 // pred_fallthru
      _
    // Predicated region
    $region14: #{tpu_custom_call.1} parent=1 // pred_check
      _
    $region15: #{tpu_custom_call.1} parent=1 // pred_check_branch
      %51 = sbr.rel (0) target = $region17
    $region16: #{tpu_custom_call.1} parent=1 // pred_region
      %53 = dma.done [#allocation3], 512
    $region17: #{tpu_custom_call.1} parent=1 // pred_fallthru
      _
    // Predicated region
    $region18: #{tpu_custom_call.1} parent=1 // pred_check
      _
    $region19: #{tpu_custom_call.1} parent=1 // pred_check_branch
      %55 = sbr.rel (0) target = $region21
    $region20: #{tpu_custom_call.1} parent=1 // pred_region
      %57 = dma.done [#allocation6], 512
    $region21: #{tpu_custom_call.1} parent=1 // pred_fallthru
      _
    // Predicated region
    $region22: #{tpu_custom_call.1} parent=1 // pred_check
      _
    $region23: #{tpu_custom_call.1} parent=1 // pred_check_branch
      %59 = sbr.rel (0) target = $region25
    $region24: #{tpu_custom_call.1} parent=1 // pred_region
      %61 = dma.done [#allocation6], 512
    $region25: #{tpu_custom_call.1} parent=1 // pred_fallthru
      _
    %p62 = scmp.eq.s32.totalorder 0, 0
    // Predicated region
    $region26: #{tpu_custom_call.1} parent=1 // pred_check
      %p63 = pneg %p62
    $region27: #{tpu_custom_call.1} parent=1 // pred_check_branch
      %65 = sbr.rel (%p63) target = $region29
    $region28: #{tpu_custom_call.1} parent=1 // pred_region
      %vm66 = vcmask 0
      %67 = vst.msk [vmem:[#allocation8] sm:$0x1] %vm66, 0.0
    $region29: #{tpu_custom_call.1} parent=1 // pred_fallthru
      _
    %v68 = vld [vmem:[#allocation2] sm:$0xff]
    %v69 = vld [vmem:[#allocation2 + $0x8] sm:$0xff]
    %v70 = vld [vmem:[#allocation2 + $0x10] sm:$0xff]
    %v71 = vld [vmem:[#allocation2 + $0x18] sm:$0xff]
    %v72 = vld [vmem:[#allocation5] sm:$0xff]
    %v73 = vld [vmem:[#allocation5 + $0x8] sm:$0xff]
    %v74 = vld [vmem:[#allocation5 + $0x10] sm:$0xff]
    %v75 = vld [vmem:[#allocation5 + $0x18] sm:$0xff]
    %v76 = vld [vmem:[#allocation7] sm:$0xff]
    %v77 = vld [vmem:[#allocation7 + $0x8] sm:$0xff]
    %v78 = vld [vmem:[#allocation7 + $0x10] sm:$0xff]
    %v79 = vld [vmem:[#allocation7 + $0x18] sm:$0xff]
    %v80 = vlaneseq
    %v81 = vand.u32 %v80, 127
    %s82 = smul.u32 0, 128
    %v83 = vstv %s82
    %v84 = vadd.s32 %v81, %v83
    %vm85 = vcmp.lt.s32.totalorder %v84, 8
    %v86 = vmul.f32 %v68, %v68
    %v87 = vmul.f32 %v69, %v69
    %v88 = vmul.f32 %v70, %v70
    %v89 = vmul.f32 %v71, %v71
    %v90 = vadd.f32 %v86, %v87
    %v91 = vadd.f32 %v90, %v88
    %v92 = vadd.f32 %v91, %v89
    %v93 = vrot.slane %v92, 4
    %v94 = vadd.f32 %v92, %v93
    %v95 = vrot.slane %v94, 2
    %v96 = vadd.f32 %v94, %v95
    %v97 = vrot.slane %v96, 1
    %v98 = vadd.f32 %v96, %v97
    %v99 = vsel %vm85, %v98, 1.0
    %v100 = vrsqrt.pop %v99
    %v101 = vmul.f32 %v100, %v99
    %v102 = vmul.f32 %v101, %v100
    %v103 = vmul.f32 0.5, %v102
    %v104 = vsub.f32 1.5, %v103
    %v105 = vmul.f32 %v100, %v104
    %vm106 = vweird.f32 %v99
    %vm107 = vweird.f32 %v100
    %vm108 = vmor %vm106, %vm107
    %v109 = vsel %vm108, %v100, %v105
    %v110 = vmul.f32 %v99, %v109
    %v111 = vmul.f32 %v68, %v109
    %v112 = vmul.f32 %v69, %v109
    %v113 = vmul.f32 %v70, %v109
    %v114 = vmul.f32 %v71, %v109
    %v115 = vsub.f32 %v111, %v72
    %v116 = vsub.f32 %v112, %v73
    %v117 = vsub.f32 %v113, %v74
    %v118 = vsub.f32 %v114, %v75
    %v119 = vsub.f32 %v111, %v76
    %v120 = vsub.f32 %v112, %v77
    %v121 = vsub.f32 %v113, %v78
    %v122 = vsub.f32 %v114, %v79
    %v123 = vmul.f32 %v115, %v115
    %v124 = vmul.f32 %v116, %v116
    %v125 = vmul.f32 %v117, %v117
    %v126 = vmul.f32 %v118, %v118
    %v127 = vadd.f32 %v123, %v124
    %v128 = vadd.f32 %v127, %v125
    %v129 = vadd.f32 %v128, %v126
    %v130 = vrot.slane %v129, 4
    %v131 = vadd.f32 %v129, %v130
    %v132 = vrot.slane %v131, 2
    %v133 = vadd.f32 %v131, %v132
    %v134 = vrot.slane %v133, 1
    %v135 = vadd.f32 %v133, %v134
    %v136 = vmul.f32 %v119, %v119
    %v137 = vmul.f32 %v120, %v120
    %v138 = vmul.f32 %v121, %v121
    %v139 = vmul.f32 %v122, %v122
    %v140 = vadd.f32 %v136, %v137
    %v141 = vadd.f32 %v140, %v138
    %v142 = vadd.f32 %v141, %v139
    %v143 = vrot.slane %v142, 4
    %v144 = vadd.f32 %v142, %v143
    %v145 = vrot.slane %v144, 2
    %v146 = vadd.f32 %v144, %v145
    %v147 = vrot.slane %v146, 1
    %v148 = vadd.f32 %v146, %v147
    %v149 = vrsqrt.pop %v148
    %v150 = vmul.f32 %v149, %v148
    %v151 = vmul.f32 %v150, %v149
    %v152 = vmul.f32 0.5, %v151
    %v153 = vsub.f32 1.5, %v152
    %v154 = vmul.f32 %v149, %v153
    %v155 = vmul.f32 %v148, %v154
    %vm156 = vcmp.eq.f32.partialorder %v148, inf
    %v157 = vsel %vm156, %v148, %v155
    %vm158 = vcmp.eq.f32.partialorder %v148, 0.0
    %v159 = vand.u32 %v148, 2147483648
    %v160 = vsel %vm158, %v159, %v157
    %v161 = vmin.f32 %v135, %v160
    %v162 = vsub.f32 %v110, 1.0
    %v163 = vand.u32 2147483647, %v162
    %v164 = vmul.f32 %v163, 0.02
    %v165 = vadd.f32 %v161, %v164
    %v166 = vsel %vm85, %v165, 0.0
    %v167 = vld [vmem:[#allocation8] sm:$0x1]
    %vm168 = vcmask 1040384
    %v169 = vsel %vm168, %v166, 0.0
    %170 = vadd.xlane.f32.xlu0 %v169
    %v171 = vpop.xlane.xlu0 %170
    %v172 = vrot.slane %v171, 4
    %v173 = vadd.f32 %v171, %v172
    %v174 = vrot.slane %v173, 2
    %v175 = vadd.f32 %v173, %v174
    %v176 = vrot.slane %v175, 1
    %v177 = vadd.f32 %v175, %v176
    %s178 = vtos %v177
    %v179 = vstv %s178
    %v180 = vadd.f32 %v167, %v179
    %vm181 = vcmask 0
    %182 = vst.msk [vmem:[#allocation8] sm:$0x1] %vm181, %v180
    // Predicated region
    $region30: #{tpu_custom_call.1} parent=1 // pred_check
      %p183 = pneg %p62
    $region31: #{tpu_custom_call.1} parent=1 // pred_check_branch
      %185 = sbr.rel (%p183) target = $region33
    $region32: #{tpu_custom_call.1} parent=1 // pred_region
      %v186 = vld [vmem:[#allocation8] sm:$0x1]
      %v187 = vmul.f32 %v186, 0.125
      %188 = vst.msk [vmem:[#allocation8] sm:$0x1] %vm181, %v187
    $region33: #{tpu_custom_call.1} parent=1 // pred_fallthru
      _
    // Predicated region
    $region34: #{tpu_custom_call.1} parent=1 // pred_check
      _
    $region35: #{tpu_custom_call.1} parent=1 // pred_check_branch
      %190 = sbr.rel (0) target = $region37
    $region36: #{tpu_custom_call.1} parent=1 // pred_region
      %192 = vsyncadd [#allocation4], 0
      %s194 = sshll.u32 [#allocation8], 4
      %s195 = int_to_ptr.vmem [resolvable:$true] %s194
      %s196 = sshll.u32 %s3, 4
      %s197 = int_to_ptr.hbm [resolvable:$true] %s196
      %199 = dma.vmem_to_hbm [thread:$0]  %s195, 16, %s197, [#allocation4]
    $region37: #{tpu_custom_call.1} parent=1 // pred_fallthru
      _
    // Predicated region
    $region38: #{tpu_custom_call.1} parent=1 // pred_check
      _
    $region39: #{tpu_custom_call.1} parent=1 // pred_check_branch
      %201 = sbr.rel (0) target = $region41
    $region40: #{tpu_custom_call.1} parent=1 // pred_region
      %203 = dma.done [#allocation4], 16
    $region41: #{tpu_custom_call.1} parent=1 // pred_fallthru
      _
    %204 = vsyncpa [#allocation3], 1
    %205 = vsyncpa [#allocation6], 1
    %206 = vsyncpa [#allocation4], 1

</llo_original>
